<compile_context>
chip_gen: v5e
topology: v5e:2x2
jax: 0.10.0
libtpu: 0.0.40
codegen_flags: <defaults>
</compile_context>

<pallas_src>
import functools

import jax
import jax.numpy as jnp
from jax.experimental import pallas as pl
from jax.experimental.pallas import tpu as pltpu


# ----------------------------- Pallas kernel --------------------------------

def ncdm_kernel(user_emb_ref, kvec_ref, evec_ref, kp_ref,
                w1_ref, b1_ref, w2_ref, b2_ref, w3_ref, b3_ref,
                pred_ref, *, hidden_dtype):
    f32 = jnp.float32

    # Prologue: bf16 activations from HBM, upcast to f32 for the VPU/EUP
    # (v5e has no bf16 VPU/EUP; this block is small: (TB, K)).
    stat_emb = jax.nn.sigmoid(user_emb_ref[...].astype(f32))        # (TB, K)
    k_diff   = jax.nn.sigmoid(kvec_ref[...].astype(f32))            # (TB, K)
    e_diff   = jax.nn.sigmoid(evec_ref[...].astype(f32))            # (TB, 1)

    # input_x = e_difficulty * (stat_emb - k_difficulty) * input_knowledge_point
    x = e_diff * (stat_emb - k_diff) * kp_ref[...].astype(f32)      # (TB, K)

    mm_dtype = w1_ref.dtype   # bf16 (or f32) matmul operands, f32 accumulation

    # PosLinear weights arrive pre-|.|-transformed and pre-transposed: (K, H1).
    z1 = jnp.dot(x.astype(mm_dtype), w1_ref[...],
                 preferred_element_type=jnp.float32) + b1_ref[...]  # (TB, H1) f32
    # Dominant sigmoid block: bf16 on v6e/v7x (bf16 EUP), f32 elsewhere.
    h1 = jax.nn.sigmoid(z1.astype(hidden_dtype))                    # (TB, H1)
    # drop_1: nn.Dropout(p=0.5) -> identity at inference

    z2 = jnp.dot(h1.astype(mm_dtype), w2_ref[...],
                 preferred_element_type=jnp.float32) + b2_ref[...]  # (TB, H2) f32
    h2 = jax.nn.sigmoid(z2.astype(hidden_dtype))                    # (TB, H2)
    # drop_2: identity at inference

    # Final H2 -> 1 projection on the VPU + XLU (avoid an N=1 MXU matmul).
    # Keep the logit / final-sigmoid path in f32 (feeds the BCE logs).
    logits = jnp.sum(h2.astype(f32) * w3_ref[...], axis=-1,
                     keepdims=True) + b3_ref[...]                   # (TB, 1)
    pred_ref[...] = jax.nn.sigmoid(logits).astype(pred_ref.dtype)


# ------------------------------- helpers -------------------------------------

def _round_up(x, m):
    return (x + m - 1) // m * m


def _cdiv(a, b):
    return -(-a // b)


def _default_hidden_dtype():
    """bf16 hidden sigmoids only on generations with a bf16 EUP (v6e / v7x)."""
    try:
        kind = jax.devices()[0].device_kind.lower()
    except Exception:
        return jnp.float32
    if ("v6" in kind) or ("v7" in kind):
        return jnp.bfloat16
    return jnp.float32


def prepare_prednet_weights(params, matmul_dtype=jnp.bfloat16):
    """PosLinear transform (2*relu(-W)+W == |W|), transpose, cast, bias reshape.

    Hoisted out of the per-batch call path: run once per parameter set.
    """
    H1 = params["w1"].shape[0]   # PyTorch layout (H1, K)
    H2 = params["w2"].shape[0]   # PyTorch layout (H2, H1)
    return {
        "w1": jnp.abs(params["w1"]).T.astype(matmul_dtype),          # (K,  H1)
        "b1": params["b1"].astype(jnp.float32).reshape(1, H1),
        "w2": jnp.abs(params["w2"]).T.astype(matmul_dtype),          # (H1, H2)
        "b2": params["b2"].astype(jnp.float32).reshape(1, H2),
        "w3": jnp.abs(params["w3"]).astype(jnp.float32).reshape(1, H2),  # VPU path
        "b3": params["b3"].astype(jnp.float32).reshape(1, 1),
    }


# ------------------------------- wrapper -------------------------------------

def ncdm_forward(params, user_id, item_id, input_knowledge_point, score,
                 *, block_b=1024, matmul_dtype=jnp.bfloat16,
                 act_dtype=jnp.bfloat16, hidden_dtype=None,
                 prepared_weights=None, vmem_limit_bytes=None):
    if hidden_dtype is None:
        hidden_dtype = _default_hidden_dtype()
    if prepared_weights is None:
        prepared_weights = prepare_prednet_weights(params, matmul_dtype)
    w1 = prepared_weights["w1"]; b1 = prepared_weights["b1"]
    w2 = prepared_weights["w2"]; b2 = prepared_weights["b2"]
    w3 = prepared_weights["w3"]; b3 = prepared_weights["b3"]

    # --- embedding gathers: plain-JAX glue, shipped to the kernel in bf16 ---
    # TODO(synk): fuse these gathers into the kernel (scalar-prefetch ids +
    # VMEM-resident tables) once Mosaic supports a general row gather.
    user_emb = params["user_emb"][user_id].astype(act_dtype)        # (B, K)
    k_vec = params["k_difficulty"][item_id].astype(act_dtype)       # (B, K)
    e_vec = params["e_difficulty"][item_id].astype(act_dtype)       # (B, 1)
    kp = input_knowledge_point.astype(act_dtype)                    # (B, K) exact in bf16

    B, K = user_emb.shape
    H1 = w1.shape[1]
    H2 = w2.shape[1]

    # Batch tiling: pick TB to minimize last-tile padding, sublane-packed (x16)
    # so bf16 activation tiles are layout-friendly.
    n_tiles = max(1, _cdiv(B, block_b))
    TB = _round_up(_cdiv(B, n_tiles), 16)
    B_pad = _round_up(B, TB)
    G = B_pad // TB

    def pad_rows(a):
        return jnp.pad(a, ((0, B_pad - B), (0, 0))) if B_pad != B else a

    user_emb, k_vec, e_vec, kp = map(pad_rows, (user_emb, k_vec, e_vec, kp))

    grid_spec = pltpu.PrefetchScalarGridSpec(
        num_scalar_prefetch=0,
        grid=(G,),
        in_specs=[
            pl.BlockSpec((TB, K), lambda i: (i, 0)),    # user_emb (streamed)
            pl.BlockSpec((TB, K), lambda i: (i, 0)),    # k_vec    (streamed)
            pl.BlockSpec((TB, 1), lambda i: (i, 0)),    # e_vec    (streamed)
            pl.BlockSpec((TB, K), lambda i: (i, 0)),    # knowledge point
            pl.BlockSpec((K, H1), lambda i: (0, 0)),    # w1 (VMEM-resident)
            pl.BlockSpec((1, H1), lambda i: (0, 0)),    # b1
            pl.BlockSpec((H1, H2), lambda i: (0, 0)),   # w2 (VMEM-resident)
            pl.BlockSpec((1, H2), lambda i: (0, 0)),    # b2
            pl.BlockSpec((1, H2), lambda i: (0, 0)),    # w3 row (VPU path)
            pl.BlockSpec((1, 1), lambda i: (0, 0)),     # b3
        ],
        out_specs=pl.BlockSpec((TB, 1), lambda i: (i, 0)),   # pred
    )

    pred_pad = pl.pallas_call(
        functools.partial(ncdm_kernel, hidden_dtype=hidden_dtype),
        out_shape=jax.ShapeDtypeStruct((B_pad, 1), jnp.float32),
        grid_spec=grid_spec,
        compiler_params=pltpu.CompilerParams(
            # batch tiles are independent -> megacore-shardable.
            # TODO(synk): switch to pltpu.CORE_PARALLEL if a v7x profile shows
            # one TensorCore idle with plain "parallel".
            dimension_semantics=("parallel",),
            vmem_limit_bytes=vmem_limit_bytes),
    )(user_emb, k_vec, e_vec, kp, w1, b1, w2, b2, w3, b3)

    prediction = pred_pad[:B, 0]                                     # (B,) f32

    # BCELoss(reduction="mean"), PyTorch semantics: log terms clamped at -100.
    s = score.astype(jnp.float32).reshape(-1)
    log_p = jnp.maximum(jnp.log(prediction), -100.0)
    log_1mp = jnp.maximum(jnp.log(1.0 - prediction), -100.0)
    loss = jnp.mean(-(s * log_p + (1.0 - s) * log_1mp))

    return {"prediction": prediction, "loss": loss}


# --------------------------- deterministic init -------------------------------

def xavier_uniform(key, shape):
    fan_out, fan_in = shape[0], shape[1]
    a = (6.0 / (fan_in + fan_out)) ** 0.5
    return jax.random.uniform(key, shape, jnp.float32, -a, a)


def linear_bias(key, fan_in, fan_out):
    bound = 1.0 / (fan_in ** 0.5)
    return jax.random.uniform(key, (1, fan_out), jnp.float32, -bound, bound)


def init_params(key, user_num, item_num, knowledge_num):
    h1, h2 = 512, 256
    ks = jax.random.split(key, 9)
    return {
        "user_emb":     xavier_uniform(ks[0], (user_num, knowledge_num)),
        "k_difficulty": xavier_uniform(ks[1], (item_num, knowledge_num)),
        "e_difficulty": xavier_uniform(ks[2], (item_num, 1)),
        "w1": xavier_uniform(ks[3], (h1, knowledge_num)),
        "b1": linear_bias(ks[4], knowledge_num, h1),
        "w2": xavier_uniform(ks[5], (h2, h1)),
        "b2": linear_bias(ks[6], h1, h2),
        "w3": xavier_uniform(ks[7], (1, h2)),
        "b3": linear_bias(ks[8], h2, 1),
    }


# --------------------------------- main ---------------------------------------

if __name__ == "__main__":
    USER_NUM, ITEM_NUM, KNOWLEDGE_NUM = 20, 15, 32
    B = 8

    key = jax.random.PRNGKey(0)
    k_param, k_u, k_i, k_kp, k_s = jax.random.split(key, 5)

    params = init_params(k_param, USER_NUM, ITEM_NUM, KNOWLEDGE_NUM)

    user_id = jax.random.randint(k_u, (B,), 0, USER_NUM)
    item_id = jax.random.randint(k_i, (B,), 0, ITEM_NUM)
    input_knowledge_point = (
        jax.random.uniform(k_kp, (B, KNOWLEDGE_NUM)) > 0.5).astype(jnp.float32)
    score = (jax.random.uniform(k_s, (B,)) > 0.5).astype(jnp.float32)

    # Weight prep hoisted out of the per-batch call path (serving pattern).
    prepared = prepare_prednet_weights(params)

    out = ncdm_forward(params, user_id, item_id, input_knowledge_point, score,
                       prepared_weights=prepared)
    jax.block_until_ready(out)

    assert out["prediction"].shape == (B,)
    assert out["loss"].shape == ()
    assert bool(jnp.all(jnp.isfinite(out["prediction"])))
    assert bool(jnp.all(out["prediction"] >= 0.0))
    assert bool(jnp.all(out["prediction"] <= 1.0))
    assert bool(jnp.isfinite(out["loss"]))
    print("KERNEL_OK")
</pallas_src>

<mosaic_0001>
module attributes {stable_mosaic.version = 11 : i64} {
  func.func @ncdm_kernel(%arg0: i32, %arg1: memref<16x32xbf16, #tpu.memory_space<vmem>>, %arg2: memref<16x32xbf16, #tpu.memory_space<vmem>>, %arg3: memref<16x1xbf16, #tpu.memory_space<vmem>>, %arg4: memref<16x32xbf16, #tpu.memory_space<vmem>>, %arg5: memref<32x512xbf16, #tpu.memory_space<vmem>>, %arg6: memref<1x512xf32, #tpu.memory_space<vmem>>, %arg7: memref<512x256xbf16, #tpu.memory_space<vmem>>, %arg8: memref<1x256xf32, #tpu.memory_space<vmem>>, %arg9: memref<1x256xf32, #tpu.memory_space<vmem>>, %arg10: memref<1x1xf32, #tpu.memory_space<vmem>>, %arg11: memref<16x1xf32, #tpu.memory_space<vmem>>) attributes {dimension_semantics = [#tpu.dimension_semantics<parallel>], iteration_bounds = array<i64: 1>, scalar_prefetch = 0 : i64, scratch_operands = 0 : i64, tpu.core_type = #tpu.core_type<tc>, window_params = [{transform_indices = @transform_0, window_bounds = array<i64: 16, 32>}, {transform_indices = @transform_1, window_bounds = array<i64: 16, 32>}, {transform_indices = @transform_2, window_bounds = array<i64: 16, 1>}, {transform_indices = @transform_3, window_bounds = array<i64: 16, 32>}, {pipeline_mode = #tpu.pipeline_mode<synchronous>, transform_indices = @transform_4, window_bounds = array<i64: 32, 512>}, {pipeline_mode = #tpu.pipeline_mode<synchronous>, transform_indices = @transform_5, window_bounds = array<i64: 1, 512>}, {pipeline_mode = #tpu.pipeline_mode<synchronous>, transform_indices = @transform_6, window_bounds = array<i64: 512, 256>}, {pipeline_mode = #tpu.pipeline_mode<synchronous>, transform_indices = @transform_7, window_bounds = array<i64: 1, 256>}, {pipeline_mode = #tpu.pipeline_mode<synchronous>, transform_indices = @transform_8, window_bounds = array<i64: 1, 256>}, {pipeline_mode = #tpu.pipeline_mode<synchronous>, transform_indices = @transform_9, window_bounds = array<i64: 1, 1>}, {transform_indices = @transform_10, window_bounds = array<i64: 16, 1>}]} {
    %c0 = arith.constant 0 : index
    %c0_0 = arith.constant 0 : index
    %0 = vector.load %arg1[%c0, %c0_0] : memref<16x32xbf16, #tpu.memory_space<vmem>>, vector<16x32xbf16>
    %1 = arith.extf %0 : vector<16x32xbf16> to vector<16x32xf32>
    %2 = arith.negf %1 : vector<16x32xf32>
    %3 = math.exp %2 : vector<16x32xf32>
    %cst = arith.constant 1.000000e+00 : f32
    %4 = vector.broadcast %cst : f32 to vector<16x32xf32>
    %5 = arith.addf %4, %3 : vector<16x32xf32>
    %6 = arith.divf %4, %5 : vector<16x32xf32>
    %c0_1 = arith.constant 0 : index
    %c0_2 = arith.constant 0 : index
    %7 = vector.load %arg2[%c0_1, %c0_2] : memref<16x32xbf16, #tpu.memory_space<vmem>>, vector<16x32xbf16>
    %8 = arith.extf %7 : vector<16x32xbf16> to vector<16x32xf32>
    %9 = arith.negf %8 : vector<16x32xf32>
    %10 = math.exp %9 : vector<16x32xf32>
    %cst_3 = arith.constant 1.000000e+00 : f32
    %11 = vector.broadcast %cst_3 : f32 to vector<16x32xf32>
    %12 = arith.addf %11, %10 : vector<16x32xf32>
    %13 = arith.divf %11, %12 : vector<16x32xf32>
    %c0_4 = arith.constant 0 : index
    %c0_5 = arith.constant 0 : index
    %14 = vector.load %arg3[%c0_4, %c0_5] : memref<16x1xbf16, #tpu.memory_space<vmem>>, vector<16x1xbf16>
    %15 = arith.extf %14 : vector<16x1xbf16> to vector<16x1xf32>
    %16 = arith.negf %15 : vector<16x1xf32>
    %17 = math.exp %16 : vector<16x1xf32>
    %cst_6 = arith.constant 1.000000e+00 : f32
    %18 = vector.broadcast %cst_6 : f32 to vector<16x1xf32>
    %19 = arith.addf %18, %17 : vector<16x1xf32>
    %20 = arith.divf %18, %19 : vector<16x1xf32>
    %21 = arith.subf %6, %13 : vector<16x32xf32>
    %22 = vector.broadcast %20 : vector<16x1xf32> to vector<16x32xf32>
    %23 = arith.mulf %22, %21 : vector<16x32xf32>
    %c0_7 = arith.constant 0 : index
    %c0_8 = arith.constant 0 : index
    %24 = vector.load %arg4[%c0_7, %c0_8] : memref<16x32xbf16, #tpu.memory_space<vmem>>, vector<16x32xbf16>
    %25 = arith.extf %24 : vector<16x32xbf16> to vector<16x32xf32>
    %26 = arith.mulf %23, %25 : vector<16x32xf32>
    %27 = arith.truncf %26 : vector<16x32xf32> to vector<16x32xbf16>
    %c0_9 = arith.constant 0 : index
    %c0_10 = arith.constant 0 : index
    %28 = vector.load %arg5[%c0_9, %c0_10] : memref<32x512xbf16, #tpu.memory_space<vmem>>, vector<32x512xbf16>
    %cst_11 = arith.constant dense<0.000000e+00> : vector<16x512xf32>
    %29 = tpu.matmul %27, %28, %cst_11 {dimension_numbers = #tpu.dot_dimension_numbers<[1], [0], [0], [1], [0, 0, 1, 1], [], []>} : vector<16x32xbf16>, vector<32x512xbf16>, vector<16x512xf32> -> vector<16x512xf32>
    %c0_12 = arith.constant 0 : index
    %c0_13 = arith.constant 0 : index
    %30 = vector.load %arg6[%c0_12, %c0_13] : memref<1x512xf32, #tpu.memory_space<vmem>>, vector<1x512xf32>
    %31 = vector.broadcast %30 : vector<1x512xf32> to vector<16x512xf32>
    %32 = arith.addf %29, %31 : vector<16x512xf32>
    %33 = arith.negf %32 : vector<16x512xf32>
    %34 = math.exp %33 : vector<16x512xf32>
    %cst_14 = arith.constant 1.000000e+00 : f32
    %35 = vector.broadcast %cst_14 : f32 to vector<16x512xf32>
    %36 = arith.addf %35, %34 : vector<16x512xf32>
    %37 = arith.divf %35, %36 : vector<16x512xf32>
    %38 = arith.truncf %37 : vector<16x512xf32> to vector<16x512xbf16>
    %c0_15 = arith.constant 0 : index
    %c0_16 = arith.constant 0 : index
    %39 = vector.load %arg7[%c0_15, %c0_16] : memref<512x256xbf16, #tpu.memory_space<vmem>>, vector<512x256xbf16>
    %cst_17 = arith.constant dense<0.000000e+00> : vector<16x256xf32>
    %40 = tpu.matmul %38, %39, %cst_17 {dimension_numbers = #tpu.dot_dimension_numbers<[1], [0], [0], [1], [0, 0, 1, 1], [], []>} : vector<16x512xbf16>, vector<512x256xbf16>, vector<16x256xf32> -> vector<16x256xf32>
    %c0_18 = arith.constant 0 : index
    %c0_19 = arith.constant 0 : index
    %41 = vector.load %arg8[%c0_18, %c0_19] : memref<1x256xf32, #tpu.memory_space<vmem>>, vector<1x256xf32>
    %42 = vector.broadcast %41 : vector<1x256xf32> to vector<16x256xf32>
    %43 = arith.addf %40, %42 : vector<16x256xf32>
    %44 = arith.negf %43 : vector<16x256xf32>
    %45 = math.exp %44 : vector<16x256xf32>
    %cst_20 = arith.constant 1.000000e+00 : f32
    %46 = vector.broadcast %cst_20 : f32 to vector<16x256xf32>
    %47 = arith.addf %46, %45 : vector<16x256xf32>
    %48 = arith.divf %46, %47 : vector<16x256xf32>
    %c0_21 = arith.constant 0 : index
    %c0_22 = arith.constant 0 : index
    %49 = vector.load %arg9[%c0_21, %c0_22] : memref<1x256xf32, #tpu.memory_space<vmem>>, vector<1x256xf32>
    %50 = vector.broadcast %49 : vector<1x256xf32> to vector<16x256xf32>
    %51 = arith.mulf %48, %50 : vector<16x256xf32>
    %cst_23 = arith.constant dense<0.000000e+00> : vector<16xf32>
    %52 = vector.multi_reduction <add>, %51, %cst_23 [1] : vector<16x256xf32> to vector<16xf32>
    %53 = vector.shape_cast %52 : vector<16xf32> to vector<16x1xf32>
    %c0_24 = arith.constant 0 : index
    %c0_25 = arith.constant 0 : index
    %54 = vector.load %arg10[%c0_24, %c0_25] : memref<1x1xf32, #tpu.memory_space<vmem>>, vector<1x1xf32>
    %55 = vector.broadcast %54 : vector<1x1xf32> to vector<16x1xf32>
    %56 = arith.addf %53, %55 : vector<16x1xf32>
    %57 = arith.negf %56 : vector<16x1xf32>
    %58 = math.exp %57 : vector<16x1xf32>
    %cst_26 = arith.constant 1.000000e+00 : f32
    %59 = vector.broadcast %cst_26 : f32 to vector<16x1xf32>
    %60 = arith.addf %59, %58 : vector<16x1xf32>
    %61 = arith.divf %59, %60 : vector<16x1xf32>
    %c0_27 = arith.constant 0 : index
    %c0_28 = arith.constant 0 : index
    %62 = vector.load %arg11[%c0_27, %c0_28] : memref<16x1xf32, #tpu.memory_space<vmem>>, vector<16x1xf32>
    tpu.vector_store %arg11[%c0_27, %c0_28], %61 {strides = array<i32>} : memref<16x1xf32, #tpu.memory_space<vmem>>, vector<16x1xf32>,
    return
  }
  func.func @transform_0(%arg0: i32) -> (i32, i32) {
    %c0_i32 = arith.constant 0 : i32
    %c0_i32_0 = arith.constant 0 : i32
    return %arg0, %c0_i32 : i32, i32
  }
  func.func @transform_1(%arg0: i32) -> (i32, i32) {
    %c0_i32 = arith.constant 0 : i32
    %c0_i32_0 = arith.constant 0 : i32
    return %arg0, %c0_i32 : i32, i32
  }
  func.func @transform_2(%arg0: i32) -> (i32, i32) {
    %c0_i32 = arith.constant 0 : i32
    %c0_i32_0 = arith.constant 0 : i32
    return %arg0, %c0_i32 : i32, i32
  }
  func.func @transform_3(%arg0: i32) -> (i32, i32) {
    %c0_i32 = arith.constant 0 : i32
    %c0_i32_0 = arith.constant 0 : i32
    return %arg0, %c0_i32 : i32, i32
  }
  func.func @transform_4(%arg0: i32) -> (i32, i32) {
    %c0_i32 = arith.constant 0 : i32
    %c0_i32_0 = arith.constant 0 : i32
    %c0_i32_1 = arith.constant 0 : i32
    return %c0_i32, %c0_i32_0 : i32, i32
  }
  func.func @transform_5(%arg0: i32) -> (i32, i32) {
    %c0_i32 = arith.constant 0 : i32
    %c0_i32_0 = arith.constant 0 : i32
    %c0_i32_1 = arith.constant 0 : i32
    return %c0_i32, %c0_i32_0 : i32, i32
  }
  func.func @transform_6(%arg0: i32) -> (i32, i32) {
    %c0_i32 = arith.constant 0 : i32
    %c0_i32_0 = arith.constant 0 : i32
    %c0_i32_1 = arith.constant 0 : i32
    return %c0_i32, %c0_i32_0 : i32, i32
  }
  func.func @transform_7(%arg0: i32) -> (i32, i32) {
    %c0_i32 = arith.constant 0 : i32
    %c0_i32_0 = arith.constant 0 : i32
    %c0_i32_1 = arith.constant 0 : i32
    return %c0_i32, %c0_i32_0 : i32, i32
  }
  func.func @transform_8(%arg0: i32) -> (i32, i32) {
    %c0_i32 = arith.constant 0 : i32
    %c0_i32_0 = arith.constant 0 : i32
    %c0_i32_1 = arith.constant 0 : i32
    return %c0_i32, %c0_i32_0 : i32, i32
  }
  func.func @transform_9(%arg0: i32) -> (i32, i32) {
    %c0_i32 = arith.constant 0 : i32
    %c0_i32_0 = arith.constant 0 : i32
    %c0_i32_1 = arith.constant 0 : i32
    return %c0_i32, %c0_i32_0 : i32, i32
  }
  func.func @transform_10(%arg0: i32) -> (i32, i32) {
    %c0_i32 = arith.constant 0 : i32
    %c0_i32_0 = arith.constant 0 : i32
    return %arg0, %c0_i32 : i32, i32
  }
}

</mosaic_0001>

<llo_original>
// kernel: tpu_custom_call.1
$region0: #{tpu_custom_call.1}
  #allocation0 [shape = 'u32[]', space=smem, size = 0x4, offset = 0x4, fixed_abs, tag = 'smem constant byte address 0x4 - core index']
  #allocation1 [shape = 'u32[72,128]{1,0:T(1,128)}', space=vmem, size = 0x9000, scoped, tag = 'internal scratch']
  #allocation2 [shape = 'f32[1,1]{1,0:T(1,128)S(1)}', space=vmem, size = 0x200, scoped, tag = 'scoped memory for tpu_custom_call.1']
  %s0 = inlined_call_operand.vmem [shape: bf16[16,32], index: 0, kind: input, shape index: {}]
  %s1 = inlined_call_operand.hbm [shape: bf16[16,32], index: 1, kind: input, shape index: {}]
  %s2 = inlined_call_operand.vmem [shape: bf16[16,1], index: 2, kind: input, shape index: {}]
  %s3 = inlined_call_operand.hbm [shape: bf16[16,32], index: 3, kind: input, shape index: {}]
  %s4 = inlined_call_operand.hbm [shape: bf16[32,512], index: 4, kind: input, shape index: {}]
  %s5 = inlined_call_operand.vmem [shape: f32[1,512], index: 5, kind: input, shape index: {}]
  %s6 = inlined_call_operand.hbm [shape: bf16[512,256], index: 6, kind: input, shape index: {}]
  %s7 = inlined_call_operand.vmem [shape: f32[1,256], index: 7, kind: input, shape index: {}]
  %s8 = inlined_call_operand.vmem [shape: f32[1,256], index: 8, kind: input, shape index: {}]
  %s9 = inlined_call_operand.<no memory space> [shape: f32[1,1], index: 9, kind: input, shape index: {}]
  %s10 = inlined_call_operand.vmem [shape: f32[16,1], index: 10, kind: output, shape index: {}]
  %s11 = sld [smem:[#allocation0]]
  $region66: #{tpu_custom_call.1} parent=0
    _
  %s13 = ssub.s32 1, %s11
  %s14 = scalar_select 0, %s13, %s11
  %v15 = vstv %s9
  %16 = vst [vmem:[#allocation2] sm:$0x1] %v15
  $region1: #{tpu_custom_call.1} parent=0
    #allocation3 [shape = 'u8[4096]{0}', space=vmem, size = 0x1000, scoped, tag = 'input window, operand 1, single buffered']
    #allocation4 [shape = 's32[1]{0}', space=sflag, size = 0x4, scoped, tag = 'scoped memory for tpu_custom_call.1']
    #allocation5 [shape = 'u8[4096]{0}', space=vmem, size = 0x1000, scoped, tag = 'input window, operand 3, single buffered']
    #allocation6 [shape = 's32[1]{0}', space=sflag, size = 0x4, scoped, tag = 'scoped memory for tpu_custom_call.1']
    #allocation7 [shape = 'u8[32768]{0}', space=vmem, size = 0x8000, scoped, tag = 'input window, operand 4, single buffered']
    #allocation8 [shape = 'u8[262144]{0}', space=vmem, size = 0x40000, scoped, tag = 'input window, operand 6, single buffered']
    #allocation9 [shape = 's32[1]{0}', space=sflag, size = 0x4, scoped, tag = 'scoped memory for tpu_custom_call.1']
    %17 = vsyncpa [#allocation4], 0
    %18 = vsyncpa [#allocation6], 0
    %19 = vsyncpa [#allocation9], 0
    // Predicated region
    $region2: #{tpu_custom_call.1} parent=1 // pred_check
      _
    $region3: #{tpu_custom_call.1} parent=1 // pred_check_branch
      %21 = sbr.rel (0) target = $region5
    $region4: #{tpu_custom_call.1} parent=1 // pred_region
      _
    $region5: #{tpu_custom_call.1} parent=1 // pred_fallthru
      _
    // Predicated region
    $region6: #{tpu_custom_call.1} parent=1 // pred_check
      _
    $region7: #{tpu_custom_call.1} parent=1 // pred_check_branch
      %23 = sbr.rel (0) target = $region9
    $region8: #{tpu_custom_call.1} parent=1 // pred_region
      %25 = vsyncadd [#allocation4], 0
      %s26 = sshll.u32 %s1, 4
      %s27 = int_to_ptr.hbm [resolvable:$true] %s26
      %s28 = sshll.u32 [#allocation3], 4
      %s29 = int_to_ptr.vmem [resolvable:$true] %s28
      %34 = dma.hbm_to_vmem [thread:$0]  %s27, 128, %s29, [#allocation4], 64, 64, 4
    $region9: #{tpu_custom_call.1} parent=1 // pred_fallthru
      _
    // Predicated region
    $region10: #{tpu_custom_call.1} parent=1 // pred_check
      _
    $region11: #{tpu_custom_call.1} parent=1 // pred_check_branch
      %36 = sbr.rel (0) target = $region13
    $region12: #{tpu_custom_call.1} parent=1 // pred_region
      _
    $region13: #{tpu_custom_call.1} parent=1 // pred_fallthru
      _
    // Predicated region
    $region14: #{tpu_custom_call.1} parent=1 // pred_check
      _
    $region15: #{tpu_custom_call.1} parent=1 // pred_check_branch
      %38 = sbr.rel (0) target = $region17
    $region16: #{tpu_custom_call.1} parent=1 // pred_region
      %40 = vsyncadd [#allocation6], 0
      %s41 = sshll.u32 %s3, 4
      %s42 = int_to_ptr.hbm [resolvable:$true] %s41
      %s43 = sshll.u32 [#allocation5], 4
      %s44 = int_to_ptr.vmem [resolvable:$true] %s43
      %49 = dma.hbm_to_vmem [thread:$0]  %s42, 128, %s44, [#allocation6], 64, 64, 4
    $region17: #{tpu_custom_call.1} parent=1 // pred_fallthru
      _
    // Predicated region
    $region18: #{tpu_custom_call.1} parent=1 // pred_check
      _
    $region19: #{tpu_custom_call.1} parent=1 // pred_check_branch
      %51 = sbr.rel (0) target = $region21
    $region20: #{tpu_custom_call.1} parent=1 // pred_region
      %53 = vsyncadd [#allocation6], 0
      %s54 = sshll.u32 %s4, 4
      %s55 = int_to_ptr.hbm [resolvable:$true] %s54
      %s56 = sshll.u32 [#allocation7], 4
      %s57 = int_to_ptr.vmem [resolvable:$true] %s56
      %62 = dma.hbm_to_vmem [thread:$0]  %s55, 1024, %s57, [#allocation6], 256, 256, 16
    $region21: #{tpu_custom_call.1} parent=1 // pred_fallthru
      _
    // Predicated region
    $region22: #{tpu_custom_call.1} parent=1 // pred_check
      _
    $region23: #{tpu_custom_call.1} parent=1 // pred_check_branch
      %64 = sbr.rel (0) target = $region25
    $region24: #{tpu_custom_call.1} parent=1 // pred_region
      _
    $region25: #{tpu_custom_call.1} parent=1 // pred_fallthru
      _
    // Predicated region
    $region26: #{tpu_custom_call.1} parent=1 // pred_check
      _
    $region27: #{tpu_custom_call.1} parent=1 // pred_check_branch
      %66 = sbr.rel (0) target = $region29
    $region28: #{tpu_custom_call.1} parent=1 // pred_region
      %68 = vsyncadd [#allocation9], 0
      %s69 = sshll.u32 %s6, 4
      %s70 = int_to_ptr.hbm [resolvable:$true] %s69
      %s71 = sshll.u32 [#allocation8], 4
      %s72 = int_to_ptr.vmem [resolvable:$true] %s71
      %77 = dma.hbm_to_vmem [thread:$0]  %s70, 8192, %s72, [#allocation9], 128, 128, 8
    $region29: #{tpu_custom_call.1} parent=1 // pred_fallthru
      _
    // Predicated region
    $region30: #{tpu_custom_call.1} parent=1 // pred_check
      _
    $region31: #{tpu_custom_call.1} parent=1 // pred_check_branch
      %79 = sbr.rel (0) target = $region33
    $region32: #{tpu_custom_call.1} parent=1 // pred_region
      _
    $region33: #{tpu_custom_call.1} parent=1 // pred_fallthru
      _
    // Predicated region
    $region34: #{tpu_custom_call.1} parent=1 // pred_check
      _
    $region35: #{tpu_custom_call.1} parent=1 // pred_check_branch
      %81 = sbr.rel (0) target = $region37
    $region36: #{tpu_custom_call.1} parent=1 // pred_region
      _
    $region37: #{tpu_custom_call.1} parent=1 // pred_fallthru
      _
    // Predicated region
    $region38: #{tpu_custom_call.1} parent=1 // pred_check
      _
    $region39: #{tpu_custom_call.1} parent=1 // pred_check_branch
      %83 = sbr.rel (0) target = $region41
    $region40: #{tpu_custom_call.1} parent=1 // pred_region
      _
    $region41: #{tpu_custom_call.1} parent=1 // pred_fallthru
      _
    // Predicated region
    $region42: #{tpu_custom_call.1} parent=1 // pred_check
      _
    $region43: #{tpu_custom_call.1} parent=1 // pred_check_branch
      %85 = sbr.rel (0) target = $region45
    $region44: #{tpu_custom_call.1} parent=1 // pred_region
      %87 = dma.done [#allocation4], 128
    $region45: #{tpu_custom_call.1} parent=1 // pred_fallthru
      _
    // Predicated region
    $region46: #{tpu_custom_call.1} parent=1 // pred_check
      _
    $region47: #{tpu_custom_call.1} parent=1 // pred_check_branch
      %89 = sbr.rel (0) target = $region49
    $region48: #{tpu_custom_call.1} parent=1 // pred_region
      %91 = dma.done [#allocation6], 128
    $region49: #{tpu_custom_call.1} parent=1 // pred_fallthru
      _
    // Predicated region
    $region50: #{tpu_custom_call.1} parent=1 // pred_check
      _
    $region51: #{tpu_custom_call.1} parent=1 // pred_check_branch
      %93 = sbr.rel (0) target = $region53
    $region52: #{tpu_custom_call.1} parent=1 // pred_region
      %95 = dma.done [#allocation6], 1024
    $region53: #{tpu_custom_call.1} parent=1 // pred_fallthru
      _
    // Predicated region
    $region54: #{tpu_custom_call.1} parent=1 // pred_check
      _
    $region55: #{tpu_custom_call.1} parent=1 // pred_check_branch
      %97 = sbr.rel (0) target = $region57
    $region56: #{tpu_custom_call.1} parent=1 // pred_region
      %99 = dma.done [#allocation9], 8192
    $region57: #{tpu_custom_call.1} parent=1 // pred_fallthru
      _
    %v101 = vld [vmem:[%s0] sm:$0xf]
    %v102 = vld [vmem:[%s0 + $0x4] sm:$0xf]
    %v103 = vunpack.c.l.bf16 %v101
    %v104 = vunpack.c.l.bf16 %v102
    %v105 = vxor.u32 %v103, 2147483648
    %v106 = vxor.u32 %v104, 2147483648
    %v107 = vmul.f32 %v105, 1.442695
    %v108 = vpow.pop %v107
    %v109 = vmul.f32 %v106, 1.442695
    %v110 = vpow.pop %v109
    %v111 = vadd.f32 %v108, 1.0
    %v112 = vadd.f32 %v110, 1.0
    %v113 = vrcp.pop %v111
    %v114 = vmul.f32 %v111, %v113
    %v115 = vsub.f32 1.0, %v114
    %v116 = vmul.f32 %v113, %v115
    %v117 = vadd.f32 %v113, %v116
    %vm118 = vweird.f32 %v111
    %vm119 = vweird.f32 %v113
    %vm120 = vmor %vm118, %vm119
    %v121 = vsel %vm120, %v113, %v117
    %v122 = vand.u32 2147483647, %v111
    %vm123 = vcmp.eq.f32.partialorder %v122, 8.507059e+37
    %v124 = vand.u32 %v111, 2147483648
    %v125 = vor.u32 1.1754944e-38, %v124
    %v126 = vsel %vm123, %v125, %v121
    %v127 = vmul.f32 1.0, %v126
    %v128 = vrcp.pop %v112
    %v129 = vmul.f32 %v112, %v128
    %v130 = vsub.f32 1.0, %v129
    %v131 = vmul.f32 %v128, %v130
    %v132 = vadd.f32 %v128, %v131
    %vm133 = vweird.f32 %v112
    %vm134 = vweird.f32 %v128
    %vm135 = vmor %vm133, %vm134
    %v136 = vsel %vm135, %v128, %v132
    %v137 = vand.u32 2147483647, %v112
    %vm138 = vcmp.eq.f32.partialorder %v137, 8.507059e+37
    %v139 = vand.u32 %v112, 2147483648
    %v140 = vor.u32 1.1754944e-38, %v139
    %v141 = vsel %vm138, %v140, %v136
    %v142 = vmul.f32 1.0, %v141
    %v143 = vld [vmem:[#allocation3] sm:$0xf]
    %v144 = vld [vmem:[#allocation3 + $0x4] sm:$0xf]
    %v145 = vunpack.c.l.bf16 %v143
    %v146 = vunpack.c.l.bf16 %v144
    %v147 = vxor.u32 %v145, 2147483648
    %v148 = vxor.u32 %v146, 2147483648
    %v149 = vmul.f32 %v147, 1.442695
    %v150 = vpow.pop %v149
    %v151 = vmul.f32 %v148, 1.442695
    %v152 = vpow.pop %v151
    %v153 = vadd.f32 %v150, 1.0
    %v154 = vadd.f32 %v152, 1.0
    %v155 = vrcp.pop %v153
    %v156 = vmul.f32 %v153, %v155
    %v157 = vsub.f32 1.0, %v156
    %v158 = vmul.f32 %v155, %v157
    %v159 = vadd.f32 %v155, %v158
    %vm160 = vweird.f32 %v153
    %vm161 = vweird.f32 %v155
    %vm162 = vmor %vm160, %vm161
    %v163 = vsel %vm162, %v155, %v159
    %v164 = vand.u32 2147483647, %v153
    %vm165 = vcmp.eq.f32.partialorder %v164, 8.507059e+37
    %v166 = vand.u32 %v153, 2147483648
    %v167 = vor.u32 1.1754944e-38, %v166
    %v168 = vsel %vm165, %v167, %v163
    %v169 = vmul.f32 1.0, %v168
    %v170 = vrcp.pop %v154
    %v171 = vmul.f32 %v154, %v170
    %v172 = vsub.f32 1.0, %v171
    %v173 = vmul.f32 %v170, %v172
    %v174 = vadd.f32 %v170, %v173
    %vm175 = vweird.f32 %v154
    %vm176 = vweird.f32 %v170
    %vm177 = vmor %vm175, %vm176
    %v178 = vsel %vm177, %v170, %v174
    %v179 = vand.u32 2147483647, %v154
    %vm180 = vcmp.eq.f32.partialorder %v179, 8.507059e+37
    %v181 = vand.u32 %v154, 2147483648
    %v182 = vor.u32 1.1754944e-38, %v181
    %v183 = vsel %vm180, %v182, %v178
    %v184 = vmul.f32 1.0, %v183
    %v185 = vld [vmem:[%s2] sm:$0xf]
    %v186 = vld [vmem:[%s2 + $0x4] sm:$0xf]
    %v187 = vunpack.c.l.bf16 %v185
    %v188 = vunpack.c.l.bf16 %v186
    %v189 = vxor.u32 %v187, 2147483648
    %v190 = vxor.u32 %v188, 2147483648
    %v191 = vmul.f32 %v189, 1.442695
    %v192 = vpow.pop %v191
    %v193 = vmul.f32 %v190, 1.442695
    %v194 = vpow.pop %v193
    %v195 = vadd.f32 %v192, 1.0
    %v196 = vadd.f32 %v194, 1.0
    %v197 = vrcp.pop %v195
    %v198 = vmul.f32 %v195, %v197
    %v199 = vsub.f32 1.0, %v198
    %v200 = vmul.f32 %v197, %v199
    %v201 = vadd.f32 %v197, %v200
    %vm202 = vweird.f32 %v195
    %vm203 = vweird.f32 %v197
    %vm204 = vmor %vm202, %vm203
    %v205 = vsel %vm204, %v197, %v201
    %v206 = vand.u32 2147483647, %v195
    %vm207 = vcmp.eq.f32.partialorder %v206, 8.507059e+37
    %v208 = vand.u32 %v195, 2147483648
    %v209 = vor.u32 1.1754944e-38, %v208
    %v210 = vsel %vm207, %v209, %v205
    %v211 = vmul.f32 1.0, %v210
    %v212 = vrcp.pop %v196
    %v213 = vmul.f32 %v196, %v212
    %v214 = vsub.f32 1.0, %v213
    %v215 = vmul.f32 %v212, %v214
    %v216 = vadd.f32 %v212, %v215
    %vm217 = vweird.f32 %v196
    %vm218 = vweird.f32 %v212
    %vm219 = vmor %vm217, %vm218
    %v220 = vsel %vm219, %v212, %v216
    %v221 = vand.u32 2147483647, %v196
    %vm222 = vcmp.eq.f32.partialorder %v221, 8.507059e+37
    %v223 = vand.u32 %v196, 2147483648
    %v224 = vor.u32 1.1754944e-38, %v223
    %v225 = vsel %vm222, %v224, %v220
    %v226 = vmul.f32 1.0, %v225
    %v227 = vsub.f32 %v127, %v169
    %v228 = vsub.f32 %v142, %v184
    %230 = vset.pattern.permute.xlu0 0
    %231 = vperm.xlu0 %230, %v211
    %v232 = vpop.permute.xlu0 %231
    %235 = vset.pattern.permute.xlu0 0
    %236 = vperm.xlu0 %235, %v226
    %v237 = vpop.permute.xlu0 %236
    %v239 = vmul.f32 %v232, %v227
    %v240 = vmul.f32 %v237, %v228
    %v241 = vld [vmem:[#allocation5] sm:$0xf]
    %v242 = vld [vmem:[#allocation5 + $0x4] sm:$0xf]
    %v243 = vunpack.c.l.bf16 %v241
    %v244 = vunpack.c.l.bf16 %v242
    %v245 = vmul.f32 %v239, %v243
    %v246 = vmul.f32 %v240, %v244
    %v247 = vpack.c.bf16 %v246, %v245
    %v248 = vld [vmem:[#allocation7] sm:$0xff]
    %v249 = vld [vmem:[#allocation7 + $0x8] sm:$0xff]
    %v250 = vld [vmem:[#allocation7 + $0x10] sm:$0xff]
    %v251 = vld [vmem:[#allocation7 + $0x18] sm:$0xff]
    %v252 = vld [vmem:[#allocation7 + $0x20] sm:$0xff]
    %v253 = vld [vmem:[#allocation7 + $0x28] sm:$0xff]
    %v254 = vld [vmem:[#allocation7 + $0x30] sm:$0xff]
    %v255 = vld [vmem:[#allocation7 + $0x38] sm:$0xff]
    %v256 = vld [vmem:[%s5] sm:$0xf]
    %v258 = vperm.slane %v256, 0
    %v259 = vperm.slane %v256, 1
    %v260 = vperm.slane %v256, 2
    %v261 = vperm.slane %v256, 3
    %v274 = vunpack.c.l.b16 %v248
    %v275 = vunpack.c.h.b16 %v248
    %v276 = vunpack.c.l.b16 %v249
    %v277 = vunpack.c.h.b16 %v249
    %v278 = vunpack.c.l.b16 %v250
    %v279 = vunpack.c.h.b16 %v250
    %v280 = vunpack.c.l.b16 %v251
    %v281 = vunpack.c.h.b16 %v251
    %v282 = vunpack.c.l.b16 %v252
    %v283 = vunpack.c.h.b16 %v252
    %v284 = vunpack.c.l.b16 %v253
    %v285 = vunpack.c.h.b16 %v253
    %v286 = vunpack.c.l.b16 %v254
    %v287 = vunpack.c.h.b16 %v254
    %v288 = vunpack.c.l.b16 %v255
    %v289 = vunpack.c.h.b16 %v255
    %v290 = vpack.c.b16 %v278, %v274
    %v291 = vpack.c.b16 %v279, %v275
    %v292 = vpack.c.b16 %v280, %v276
    %v293 = vpack.c.b16 %v281, %v277
    %v294 = vpack.c.b16 %v286, %v282
    %v295 = vpack.c.b16 %v287, %v283
    %v296 = vpack.c.b16 %v288, %v284
    %v297 = vpack.c.b16 %v289, %v285
    %vm306 = vcmask 261120
    %v308 = vsel %vm306, %v247, 0
    %310 = vmatpush.bf16.msra.mxu0 0
    %311 = vmatpush.bf16.msra.mxu0 0
    %312 = vmatpush.bf16.msra.mxu0 0
    %313 = vmatpush.bf16.msra.mxu0 0
    %314 = vmatpush.bf16.msra.mxu0 0
    %315 = vmatpush.bf16.msra.mxu0 0
    %316 = vmatpush.bf16.msra.mxu0 %v294
    %317 = vmatpush.bf16.msra.mxu0 %v290
    %318 = vmatmul.bf16.gmra.mxu0 %v308
    %v319 = vpop.f32.mrf.mxu0
    %v320 = vadd.f32 %v258, %v319
    %v321 = vpop.f32.mrf.mxu0
    %v322 = vadd.f32 %v258, %v321
    %323 = vdwg.mxu0
    %324 = vmatpush.bf16.msra.mxu0 0
    %325 = vmatpush.bf16.msra.mxu0 0
    %326 = vmatpush.bf16.msra.mxu0 0
    %327 = vmatpush.bf16.msra.mxu0 0
    %328 = vmatpush.bf16.msra.mxu0 0
    %329 = vmatpush.bf16.msra.mxu0 0
    %330 = vmatpush.bf16.msra.mxu0 %v295
    %331 = vmatpush.bf16.msra.mxu0 %v291
    %332 = vmatmul.bf16.gmra.mxu0 %v308
    %v333 = vpop.f32.mrf.mxu0
    %v334 = vadd.f32 %v259, %v333
    %v335 = vpop.f32.mrf.mxu0
    %v336 = vadd.f32 %v259, %v335
    %337 = vdwg.mxu0
    %338 = vmatpush.bf16.msra.mxu0 0
    %339 = vmatpush.bf16.msra.mxu0 0
    %340 = vmatpush.bf16.msra.mxu0 0
    %341 = vmatpush.bf16.msra.mxu0 0
    %342 = vmatpush.bf16.msra.mxu0 0
    %343 = vmatpush.bf16.msra.mxu0 0
    %344 = vmatpush.bf16.msra.mxu0 %v296
    %345 = vmatpush.bf16.msra.mxu0 %v292
    %346 = vmatmul.bf16.gmra.mxu0 %v308
    %v347 = vpop.f32.mrf.mxu0
    %v348 = vadd.f32 %v260, %v347
    %v349 = vpop.f32.mrf.mxu0
    %v350 = vadd.f32 %v260, %v349
    %351 = vdwg.mxu0
    %352 = vmatpush.bf16.msra.mxu0 0
    %353 = vmatpush.bf16.msra.mxu0 0
    %354 = vmatpush.bf16.msra.mxu0 0
    %355 = vmatpush.bf16.msra.mxu0 0
    %356 = vmatpush.bf16.msra.mxu0 0
    %357 = vmatpush.bf16.msra.mxu0 0
    %358 = vmatpush.bf16.msra.mxu0 %v297
    %359 = vmatpush.bf16.msra.mxu0 %v293
    %360 = vmatmul.bf16.gmra.mxu0 %v308
    %v361 = vpop.f32.mrf.mxu0
    %v362 = vadd.f32 %v261, %v361
    %v363 = vpop.f32.mrf.mxu0
    %v364 = vadd.f32 %v261, %v363
    %365 = vdwg.mxu0
    %v366 = vxor.u32 %v320, 2147483648
    %v367 = vxor.u32 %v334, 2147483648
    %v368 = vxor.u32 %v348, 2147483648
    %v369 = vxor.u32 %v362, 2147483648
    %v370 = vxor.u32 %v322, 2147483648
    %v371 = vxor.u32 %v336, 2147483648
    %v372 = vxor.u32 %v350, 2147483648
    %v373 = vxor.u32 %v364, 2147483648
    %v374 = vmul.f32 %v366, 1.442695
    %v375 = vpow.pop %v374
    %v376 = vmul.f32 %v367, 1.442695
    %v377 = vpow.pop %v376
    %v378 = vmul.f32 %v368, 1.442695
    %v379 = vpow.pop %v378
    %v380 = vmul.f32 %v369, 1.442695
    %v381 = vpow.pop %v380
    %v382 = vmul.f32 %v370, 1.442695
    %v383 = vpow.pop %v382
    %v384 = vmul.f32 %v371, 1.442695
    %v385 = vpow.pop %v384
    %v386 = vmul.f32 %v372, 1.442695
    %v387 = vpow.pop %v386
    %v388 = vmul.f32 %v373, 1.442695
    %v389 = vpow.pop %v388
    %v390 = vadd.f32 %v375, 1.0
    %v391 = vadd.f32 %v377, 1.0
    %v392 = vadd.f32 %v379, 1.0
    %v393 = vadd.f32 %v381, 1.0
    %v394 = vadd.f32 %v383, 1.0
    %v395 = vadd.f32 %v385, 1.0
    %v396 = vadd.f32 %v387, 1.0
    %v397 = vadd.f32 %v389, 1.0
    %v398 = vrcp.pop %v390
    %v399 = vmul.f32 %v390, %v398
    %v400 = vsub.f32 1.0, %v399
    %v401 = vmul.f32 %v398, %v400
    %v402 = vadd.f32 %v398, %v401
    %vm403 = vweird.f32 %v390
    %vm404 = vweird.f32 %v398
    %vm405 = vmor %vm403, %vm404
    %v406 = vsel %vm405, %v398, %v402
    %v407 = vand.u32 2147483647, %v390
    %vm408 = vcmp.eq.f32.partialorder %v407, 8.507059e+37
    %v409 = vand.u32 %v390, 2147483648
    %v410 = vor.u32 1.1754944e-38, %v409
    %v411 = vsel %vm408, %v410, %v406
    %v412 = vmul.f32 1.0, %v411
    %v413 = vrcp.pop %v391
    %v414 = vmul.f32 %v391, %v413
    %v415 = vsub.f32 1.0, %v414
    %v416 = vmul.f32 %v413, %v415
    %v417 = vadd.f32 %v413, %v416
    %vm418 = vweird.f32 %v391
    %vm419 = vweird.f32 %v413
    %vm420 = vmor %vm418, %vm419
    %v421 = vsel %vm420, %v413, %v417
    %v422 = vand.u32 2147483647, %v391
    %vm423 = vcmp.eq.f32.partialorder %v422, 8.507059e+37
    %v424 = vand.u32 %v391, 2147483648
    %v425 = vor.u32 1.1754944e-38, %v424
    %v426 = vsel %vm423, %v425, %v421
    %v427 = vmul.f32 1.0, %v426
    %v428 = vrcp.pop %v392
    %v429 = vmul.f32 %v392, %v428
    %v430 = vsub.f32 1.0, %v429
    %v431 = vmul.f32 %v428, %v430
    %v432 = vadd.f32 %v428, %v431
    %vm433 = vweird.f32 %v392
    %vm434 = vweird.f32 %v428
    %vm435 = vmor %vm433, %vm434
    %v436 = vsel %vm435, %v428, %v432
    %v437 = vand.u32 2147483647, %v392
    %vm438 = vcmp.eq.f32.partialorder %v437, 8.507059e+37
    %v439 = vand.u32 %v392, 2147483648
    %v440 = vor.u32 1.1754944e-38, %v439
    %v441 = vsel %vm438, %v440, %v436
    %v442 = vmul.f32 1.0, %v441
    %v443 = vrcp.pop %v393
    %v444 = vmul.f32 %v393, %v443
    %v445 = vsub.f32 1.0, %v444
    %v446 = vmul.f32 %v443, %v445
    %v447 = vadd.f32 %v443, %v446
    %vm448 = vweird.f32 %v393
    %vm449 = vweird.f32 %v443
    %vm450 = vmor %vm448, %vm449
    %v451 = vsel %vm450, %v443, %v447
    %v452 = vand.u32 2147483647, %v393
    %vm453 = vcmp.eq.f32.partialorder %v452, 8.507059e+37
    %v454 = vand.u32 %v393, 2147483648
    %v455 = vor.u32 1.1754944e-38, %v454
    %v456 = vsel %vm453, %v455, %v451
    %v457 = vmul.f32 1.0, %v456
    %v458 = vrcp.pop %v394
    %v459 = vmul.f32 %v394, %v458
    %v460 = vsub.f32 1.0, %v459
    %v461 = vmul.f32 %v458, %v460
    %v462 = vadd.f32 %v458, %v461
    %vm463 = vweird.f32 %v394
    %vm464 = vweird.f32 %v458
    %vm465 = vmor %vm463, %vm464
    %v466 = vsel %vm465, %v458, %v462
    %v467 = vand.u32 2147483647, %v394
    %vm468 = vcmp.eq.f32.partialorder %v467, 8.507059e+37
    %v469 = vand.u32 %v394, 2147483648
    %v470 = vor.u32 1.1754944e-38, %v469
    %v471 = vsel %vm468, %v470, %v466
    %v472 = vmul.f32 1.0, %v471
    %v473 = vrcp.pop %v395
    %v474 = vmul.f32 %v395, %v473
    %v475 = vsub.f32 1.0, %v474
    %v476 = vmul.f32 %v473, %v475
    %v477 = vadd.f32 %v473, %v476
    %vm478 = vweird.f32 %v395
    %vm479 = vweird.f32 %v473
    %vm480 = vmor %vm478, %vm479
    %v481 = vsel %vm480, %v473, %v477
    %v482 = vand.u32 2147483647, %v395
    %vm483 = vcmp.eq.f32.partialorder %v482, 8.507059e+37
    %v484 = vand.u32 %v395, 2147483648
    %v485 = vor.u32 1.1754944e-38, %v484
    %v486 = vsel %vm483, %v485, %v481
    %v487 = vmul.f32 1.0, %v486
    %v488 = vrcp.pop %v396
    %v489 = vmul.f32 %v396, %v488
    %v490 = vsub.f32 1.0, %v489
    %v491 = vmul.f32 %v488, %v490
    %v492 = vadd.f32 %v488, %v491
    %vm493 = vweird.f32 %v396
    %vm494 = vweird.f32 %v488
    %vm495 = vmor %vm493, %vm494
    %v496 = vsel %vm495, %v488, %v492
    %v497 = vand.u32 2147483647, %v396
    %vm498 = vcmp.eq.f32.partialorder %v497, 8.507059e+37
    %v499 = vand.u32 %v396, 2147483648
    %v500 = vor.u32 1.1754944e-38, %v499
    %v501 = vsel %vm498, %v500, %v496
    %v502 = vmul.f32 1.0, %v501
    %v503 = vrcp.pop %v397
    %v504 = vmul.f32 %v397, %v503
    %v505 = vsub.f32 1.0, %v504
    %v506 = vmul.f32 %v503, %v505
    %v507 = vadd.f32 %v503, %v506
    %vm508 = vweird.f32 %v397
    %vm509 = vweird.f32 %v503
    %vm510 = vmor %vm508, %vm509
    %v511 = vsel %vm510, %v503, %v507
    %v512 = vand.u32 2147483647, %v397
    %vm513 = vcmp.eq.f32.partialorder %v512, 8.507059e+37
    %v514 = vand.u32 %v397, 2147483648
    %v515 = vor.u32 1.1754944e-38, %v514
    %v516 = vsel %vm513, %v515, %v511
    %v517 = vmul.f32 1.0, %v516
    %v518 = vpack.c.bf16 %v472, %v412
    %v519 = vpack.c.bf16 %v487, %v427
    %v520 = vpack.c.bf16 %v502, %v442
    %v521 = vpack.c.bf16 %v517, %v457
    %v522 = vld [vmem:[#allocation8] sm:$0xff]
    %v523 = vld [vmem:[#allocation8 + $0x8] sm:$0xff]
    %v524 = vld [vmem:[#allocation8 + $0x10] sm:$0xff]
    %v525 = vld [vmem:[#allocation8 + $0x18] sm:$0xff]
    %v526 = vld [vmem:[#allocation8 + $0x20] sm:$0xff]
    %v527 = vld [vmem:[#allocation8 + $0x28] sm:$0xff]
    %v528 = vld [vmem:[#allocation8 + $0x30] sm:$0xff]
    %v529 = vld [vmem:[#allocation8 + $0x38] sm:$0xff]
    %v530 = vld [vmem:[#allocation8 + $0x40] sm:$0xff]
    %v531 = vld [vmem:[#allocation8 + $0x48] sm:$0xff]
    %v532 = vld [vmem:[#allocation8 + $0x50] sm:$0xff]
    %v533 = vld [vmem:[#allocation8 + $0x58] sm:$0xff]
    %v534 = vld [vmem:[#allocation8 + $0x60] sm:$0xff]
    %v535 = vld [vmem:[#allocation8 + $0x68] sm:$0xff]
    %v536 = vld [vmem:[#allocation8 + $0x70] sm:$0xff]
    %v537 = vld [vmem:[#allocation8 + $0x78] sm:$0xff]
    %v538 = vld [vmem:[#allocation8 + $0x80] sm:$0xff]
    %v539 = vld [vmem:[#allocation8 + $0x88] sm:$0xff]
    %v540 = vld [vmem:[#allocation8 + $0x90] sm:$0xff]
    %v541 = vld [vmem:[#allocation8 + $0x98] sm:$0xff]
    %v542 = vld [vmem:[#allocation8 + $0xa0] sm:$0xff]
    %v543 = vld [vmem:[#allocation8 + $0xa8] sm:$0xff]
    %v544 = vld [vmem:[#allocation8 + $0xb0] sm:$0xff]
    %v545 = vld [vmem:[#allocation8 + $0xb8] sm:$0xff]
    %v546 = vld [vmem:[#allocation8 + $0xc0] sm:$0xff]
    %v547 = vld [vmem:[#allocation8 + $0xc8] sm:$0xff]
    %v548 = vld [vmem:[#allocation8 + $0xd0] sm:$0xff]
    %v549 = vld [vmem:[#allocation8 + $0xd8] sm:$0xff]
    %v550 = vld [vmem:[#allocation8 + $0xe0] sm:$0xff]
    %v551 = vld [vmem:[#allocation8 + $0xe8] sm:$0xff]
    %v552 = vld [vmem:[#allocation8 + $0xf0] sm:$0xff]
    %v553 = vld [vmem:[#allocation8 + $0xf8] sm:$0xff]
    %v554 = vld [vmem:[#allocation8 + $0x100] sm:$0xff]
    %v555 = vld [vmem:[#allocation8 + $0x108] sm:$0xff]
    %v556 = vld [vmem:[#allocation8 + $0x110] sm:$0xff]
    %v557 = vld [vmem:[#allocation8 + $0x118] sm:$0xff]
    %v558 = vld [vmem:[#allocation8 + $0x120] sm:$0xff]
    %v559 = vld [vmem:[#allocation8 + $0x128] sm:$0xff]
    %v560 = vld [vmem:[#allocation8 + $0x130] sm:$0xff]
    %v561 = vld [vmem:[#allocation8 + $0x138] sm:$0xff]
    %v562 = vld [vmem:[#allocation8 + $0x140] sm:$0xff]
    %v563 = vld [vmem:[#allocation8 + $0x148] sm:$0xff]
    %v564 = vld [vmem:[#allocation8 + $0x150] sm:$0xff]
    %v565 = vld [vmem:[#allocation8 + $0x158] sm:$0xff]
    %v566 = vld [vmem:[#allocation8 + $0x160] sm:$0xff]
    %v567 = vld [vmem:[#allocation8 + $0x168] sm:$0xff]
    %v568 = vld [vmem:[#allocation8 + $0x170] sm:$0xff]
    %v569 = vld [vmem:[#allocation8 + $0x178] sm:$0xff]
    %v570 = vld [vmem:[#allocation8 + $0x180] sm:$0xff]
    %v571 = vld [vmem:[#allocation8 + $0x188] sm:$0xff]
    %v572 = vld [vmem:[#allocation8 + $0x190] sm:$0xff]
    %v573 = vld [vmem:[#allocation8 + $0x198] sm:$0xff]
    %v574 = vld [vmem:[#allocation8 + $0x1a0] sm:$0xff]
    %v575 = vld [vmem:[#allocation8 + $0x1a8] sm:$0xff]
    %v576 = vld [vmem:[#allocation8 + $0x1b0] sm:$0xff]
    %v577 = vld [vmem:[#allocation8 + $0x1b8] sm:$0xff]
    %v578 = vld [vmem:[#allocation8 + $0x1c0] sm:$0xff]
    %v579 = vld [vmem:[#allocation8 + $0x1c8] sm:$0xff]
    %v580 = vld [vmem:[#allocation8 + $0x1d0] sm:$0xff]
    %v581 = vld [vmem:[#allocation8 + $0x1d8] sm:$0xff]
    %v582 = vld [vmem:[#allocation8 + $0x1e0] sm:$0xff]
    %v583 = vld [vmem:[#allocation8 + $0x1e8] sm:$0xff]
    %v584 = vld [vmem:[#allocation8 + $0x1f0] sm:$0xff]
    %v585 = vld [vmem:[#allocation8 + $0x1f8] sm:$0xff]
    %v586 = vld [vmem:[%s7] sm:$0x3]
    %v588 = vperm.slane %v586, 0
    %v589 = vperm.slane %v586, 1
    %v656 = vunpack.c.l.b16 %v522
    %v657 = vunpack.c.h.b16 %v522
    %v658 = vunpack.c.l.b16 %v523
    %v659 = vunpack.c.h.b16 %v523
    %v660 = vunpack.c.l.b16 %v524
    %v661 = vunpack.c.h.b16 %v524
    %v662 = vunpack.c.l.b16 %v525
    %v663 = vunpack.c.h.b16 %v525
    %v664 = vunpack.c.l.b16 %v526
    %v665 = vunpack.c.h.b16 %v526
    %v666 = vunpack.c.l.b16 %v527
    %v667 = vunpack.c.h.b16 %v527
    %v668 = vunpack.c.l.b16 %v528
    %v669 = vunpack.c.h.b16 %v528
    %v670 = vunpack.c.l.b16 %v529
    %v671 = vunpack.c.h.b16 %v529
    %v672 = vunpack.c.l.b16 %v530
    %v673 = vunpack.c.h.b16 %v530
    %v674 = vunpack.c.l.b16 %v531
    %v675 = vunpack.c.h.b16 %v531
    %v676 = vunpack.c.l.b16 %v532
    %v677 = vunpack.c.h.b16 %v532
    %v678 = vunpack.c.l.b16 %v533
    %v679 = vunpack.c.h.b16 %v533
    %v680 = vunpack.c.l.b16 %v534
    %v681 = vunpack.c.h.b16 %v534
    %v682 = vunpack.c.l.b16 %v535
    %v683 = vunpack.c.h.b16 %v535
    %v684 = vunpack.c.l.b16 %v536
    %v685 = vunpack.c.h.b16 %v536
    %v686 = vunpack.c.l.b16 %v537
    %v687 = vunpack.c.h.b16 %v537
    %v688 = vunpack.c.l.b16 %v538
    %v689 = vunpack.c.h.b16 %v538
    %v690 = vunpack.c.l.b16 %v539
    %v691 = vunpack.c.h.b16 %v539
    %v692 = vunpack.c.l.b16 %v540
    %v693 = vunpack.c.h.b16 %v540
    %v694 = vunpack.c.l.b16 %v541
    %v695 = vunpack.c.h.b16 %v541
    %v696 = vunpack.c.l.b16 %v542
    %v697 = vunpack.c.h.b16 %v542
    %v698 = vunpack.c.l.b16 %v543
    %v699 = vunpack.c.h.b16 %v543
    %v700 = vunpack.c.l.b16 %v544
    %v701 = vunpack.c.h.b16 %v544
    %v702 = vunpack.c.l.b16 %v545
    %v703 = vunpack.c.h.b16 %v545
    %v704 = vunpack.c.l.b16 %v546
    %v705 = vunpack.c.h.b16 %v546
    %v706 = vunpack.c.l.b16 %v547
    %v707 = vunpack.c.h.b16 %v547
    %v708 = vunpack.c.l.b16 %v548
    %v709 = vunpack.c.h.b16 %v548
    %v710 = vunpack.c.l.b16 %v549
    %v711 = vunpack.c.h.b16 %v549
    %v712 = vunpack.c.l.b16 %v550
    %v713 = vunpack.c.h.b16 %v550
    %v714 = vunpack.c.l.b16 %v551
    %v715 = vunpack.c.h.b16 %v551
    %v716 = vunpack.c.l.b16 %v552
    %v717 = vunpack.c.h.b16 %v552
    %v718 = vunpack.c.l.b16 %v553
    %v719 = vunpack.c.h.b16 %v553
    %v720 = vunpack.c.l.b16 %v554
    %v721 = vunpack.c.h.b16 %v554
    %v722 = vunpack.c.l.b16 %v555
    %v723 = vunpack.c.h.b16 %v555
    %v724 = vunpack.c.l.b16 %v556
    %v725 = vunpack.c.h.b16 %v556
    %v726 = vunpack.c.l.b16 %v557
    %v727 = vunpack.c.h.b16 %v557
    %v728 = vunpack.c.l.b16 %v558
    %v729 = vunpack.c.h.b16 %v558
    %v730 = vunpack.c.l.b16 %v559
    %v731 = vunpack.c.h.b16 %v559
    %v732 = vunpack.c.l.b16 %v560
    %v733 = vunpack.c.h.b16 %v560
    %v734 = vunpack.c.l.b16 %v561
    %v735 = vunpack.c.h.b16 %v561
    %v736 = vunpack.c.l.b16 %v562
    %v737 = vunpack.c.h.b16 %v562
    %v738 = vunpack.c.l.b16 %v563
    %v739 = vunpack.c.h.b16 %v563
    %v740 = vunpack.c.l.b16 %v564
    %v741 = vunpack.c.h.b16 %v564
    %v742 = vunpack.c.l.b16 %v565
    %v743 = vunpack.c.h.b16 %v565
    %v744 = vunpack.c.l.b16 %v566
    %v745 = vunpack.c.h.b16 %v566
    %v746 = vunpack.c.l.b16 %v567
    %v747 = vunpack.c.h.b16 %v567
    %v748 = vunpack.c.l.b16 %v568
    %v749 = vunpack.c.h.b16 %v568
    %v750 = vunpack.c.l.b16 %v569
    %v751 = vunpack.c.h.b16 %v569
    %v752 = vunpack.c.l.b16 %v570
    %v753 = vunpack.c.h.b16 %v570
    %v754 = vunpack.c.l.b16 %v571
    %v755 = vunpack.c.h.b16 %v571
    %v756 = vunpack.c.l.b16 %v572
    %v757 = vunpack.c.h.b16 %v572
    %v758 = vunpack.c.l.b16 %v573
    %v759 = vunpack.c.h.b16 %v573
    %v760 = vunpack.c.l.b16 %v574
    %v761 = vunpack.c.h.b16 %v574
    %v762 = vunpack.c.l.b16 %v575
    %v763 = vunpack.c.h.b16 %v575
    %v764 = vunpack.c.l.b16 %v576
    %v765 = vunpack.c.h.b16 %v576
    %v766 = vunpack.c.l.b16 %v577
    %v767 = vunpack.c.h.b16 %v577
    %v768 = vunpack.c.l.b16 %v578
    %v769 = vunpack.c.h.b16 %v578
    %v770 = vunpack.c.l.b16 %v579
    %v771 = vunpack.c.h.b16 %v579
    %v772 = vunpack.c.l.b16 %v580
    %v773 = vunpack.c.h.b16 %v580
    %v774 = vunpack.c.l.b16 %v581
    %v775 = vunpack.c.h.b16 %v581
    %v776 = vunpack.c.l.b16 %v582
    %v777 = vunpack.c.h.b16 %v582
    %v778 = vunpack.c.l.b16 %v583
    %v779 = vunpack.c.h.b16 %v583
    %v780 = vunpack.c.l.b16 %v584
    %v781 = vunpack.c.h.b16 %v584
    %v782 = vunpack.c.l.b16 %v585
    %v783 = vunpack.c.h.b16 %v585
    %v784 = vpack.c.b16 %v658, %v656
    %v785 = vpack.c.b16 %v659, %v657
    %v786 = vpack.c.b16 %v662, %v660
    %v787 = vpack.c.b16 %v663, %v661
    %v788 = vpack.c.b16 %v666, %v664
    %v789 = vpack.c.b16 %v667, %v665
    %v790 = vpack.c.b16 %v670, %v668
    %v791 = vpack.c.b16 %v671, %v669
    %v792 = vpack.c.b16 %v674, %v672
    %v793 = vpack.c.b16 %v675, %v673
    %v794 = vpack.c.b16 %v678, %v676
    %v795 = vpack.c.b16 %v679, %v677
    %v796 = vpack.c.b16 %v682, %v680
    %v797 = vpack.c.b16 %v683, %v681
    %v798 = vpack.c.b16 %v686, %v684
    %v799 = vpack.c.b16 %v687, %v685
    %v800 = vpack.c.b16 %v690, %v688
    %v801 = vpack.c.b16 %v691, %v689
    %v802 = vpack.c.b16 %v694, %v692
    %v803 = vpack.c.b16 %v695, %v693
    %v804 = vpack.c.b16 %v698, %v696
    %v805 = vpack.c.b16 %v699, %v697
    %v806 = vpack.c.b16 %v702, %v700
    %v807 = vpack.c.b16 %v703, %v701
    %v808 = vpack.c.b16 %v706, %v704
    %v809 = vpack.c.b16 %v707, %v705
    %v810 = vpack.c.b16 %v710, %v708
    %v811 = vpack.c.b16 %v711, %v709
    %v812 = vpack.c.b16 %v714, %v712
    %v813 = vpack.c.b16 %v715, %v713
    %v814 = vpack.c.b16 %v718, %v716
    %v815 = vpack.c.b16 %v719, %v717
    %v816 = vpack.c.b16 %v722, %v720
    %v817 = vpack.c.b16 %v723, %v721
    %v818 = vpack.c.b16 %v726, %v724
    %v819 = vpack.c.b16 %v727, %v725
    %v820 = vpack.c.b16 %v730, %v728
    %v821 = vpack.c.b16 %v731, %v729
    %v822 = vpack.c.b16 %v734, %v732
    %v823 = vpack.c.b16 %v735, %v733
    %v824 = vpack.c.b16 %v738, %v736
    %v825 = vpack.c.b16 %v739, %v737
    %v826 = vpack.c.b16 %v742, %v740
    %v827 = vpack.c.b16 %v743, %v741
    %v828 = vpack.c.b16 %v746, %v744
    %v829 = vpack.c.b16 %v747, %v745
    %v830 = vpack.c.b16 %v750, %v748
    %v831 = vpack.c.b16 %v751, %v749
    %v832 = vpack.c.b16 %v754, %v752
    %v833 = vpack.c.b16 %v755, %v753
    %v834 = vpack.c.b16 %v758, %v756
    %v835 = vpack.c.b16 %v759, %v757
    %v836 = vpack.c.b16 %v762, %v760
    %v837 = vpack.c.b16 %v763, %v761
    %v838 = vpack.c.b16 %v766, %v764
    %v839 = vpack.c.b16 %v767, %v765
    %v840 = vpack.c.b16 %v770, %v768
    %v841 = vpack.c.b16 %v771, %v769
    %v842 = vpack.c.b16 %v774, %v772
    %v843 = vpack.c.b16 %v775, %v773
    %v844 = vpack.c.b16 %v778, %v776
    %v845 = vpack.c.b16 %v779, %v777
    %v846 = vpack.c.b16 %v782, %v780
    %v847 = vpack.c.b16 %v783, %v781
    %912 = vmatpush.bf16.msra.mxu0 %v798
    %913 = vmatpush.bf16.msra.mxu0 %v796
    %914 = vmatpush.bf16.msra.mxu0 %v794
    %915 = vmatpush.bf16.msra.mxu0 %v792
    %916 = vmatpush.bf16.msra.mxu0 %v790
    %917 = vmatpush.bf16.msra.mxu0 %v788
    %918 = vmatpush.bf16.msra.mxu0 %v786
    %919 = vmatpush.bf16.msra.mxu0 %v784
    %920 = vmatmul.bf16.gmra.mxu0 %v518
    %v921 = vpop.f32.mrf.mxu0
    %v922 = vadd.f32 %v588, %v921
    %v923 = vpop.f32.mrf.mxu0
    %v924 = vadd.f32 %v588, %v923
    %925 = vdwg.mxu0
    %926 = vmatpush.bf16.msra.mxu0 %v814
    %927 = vmatpush.bf16.msra.mxu0 %v812
    %928 = vmatpush.bf16.msra.mxu0 %v810
    %929 = vmatpush.bf16.msra.mxu0 %v808
    %930 = vmatpush.bf16.msra.mxu0 %v806
    %931 = vmatpush.bf16.msra.mxu0 %v804
    %932 = vmatpush.bf16.msra.mxu0 %v802
    %933 = vmatpush.bf16.msra.mxu0 %v800
    %934 = vmatmul.bf16.gmra.mxu0 %v519
    %v935 = vpop.f32.mrf.mxu0
    %v936 = vadd.f32 %v922, %v935
    %v937 = vpop.f32.mrf.mxu0
    %v938 = vadd.f32 %v924, %v937
    %939 = vdwg.mxu0
    %940 = vmatpush.bf16.msra.mxu0 %v830
    %941 = vmatpush.bf16.msra.mxu0 %v828
    %942 = vmatpush.bf16.msra.mxu0 %v826
    %943 = vmatpush.bf16.msra.mxu0 %v824
    %944 = vmatpush.bf16.msra.mxu0 %v822
    %945 = vmatpush.bf16.msra.mxu0 %v820
    %946 = vmatpush.bf16.msra.mxu0 %v818
    %947 = vmatpush.bf16.msra.mxu0 %v816
    %948 = vmatmul.bf16.gmra.mxu0 %v520
    %v949 = vpop.f32.mrf.mxu0
    %v950 = vadd.f32 %v936, %v949
    %v951 = vpop.f32.mrf.mxu0
    %v952 = vadd.f32 %v938, %v951
    %953 = vdwg.mxu0
    %954 = vmatpush.bf16.msra.mxu0 %v846
    %955 = vmatpush.bf16.msra.mxu0 %v844
    %956 = vmatpush.bf16.msra.mxu0 %v842
    %957 = vmatpush.bf16.msra.mxu0 %v840
    %958 = vmatpush.bf16.msra.mxu0 %v838
    %959 = vmatpush.bf16.msra.mxu0 %v836
    %960 = vmatpush.bf16.msra.mxu0 %v834
    %961 = vmatpush.bf16.msra.mxu0 %v832
    %962 = vmatmul.bf16.gmra.mxu0 %v521
    %v963 = vpop.f32.mrf.mxu0
    %v964 = vadd.f32 %v950, %v963
    %v965 = vpop.f32.mrf.mxu0
    %v966 = vadd.f32 %v952, %v965
    %967 = vdwg.mxu0
    %968 = vmatpush.bf16.msra.mxu0 %v799
    %969 = vmatpush.bf16.msra.mxu0 %v797
    %970 = vmatpush.bf16.msra.mxu0 %v795
    %971 = vmatpush.bf16.msra.mxu0 %v793
    %972 = vmatpush.bf16.msra.mxu0 %v791
    %973 = vmatpush.bf16.msra.mxu0 %v789
    %974 = vmatpush.bf16.msra.mxu0 %v787
    %975 = vmatpush.bf16.msra.mxu0 %v785
    %976 = vmatmul.bf16.gmra.mxu0 %v518
    %v977 = vpop.f32.mrf.mxu0
    %v978 = vadd.f32 %v589, %v977
    %v979 = vpop.f32.mrf.mxu0
    %v980 = vadd.f32 %v589, %v979
    %981 = vdwg.mxu0
    %982 = vmatpush.bf16.msra.mxu0 %v815
    %983 = vmatpush.bf16.msra.mxu0 %v813
    %984 = vmatpush.bf16.msra.mxu0 %v811
    %985 = vmatpush.bf16.msra.mxu0 %v809
    %986 = vmatpush.bf16.msra.mxu0 %v807
    %987 = vmatpush.bf16.msra.mxu0 %v805
    %988 = vmatpush.bf16.msra.mxu0 %v803
    %989 = vmatpush.bf16.msra.mxu0 %v801
    %990 = vmatmul.bf16.gmra.mxu0 %v519
    %v991 = vpop.f32.mrf.mxu0
    %v992 = vadd.f32 %v978, %v991
    %v993 = vpop.f32.mrf.mxu0
    %v994 = vadd.f32 %v980, %v993
    %995 = vdwg.mxu0
    %996 = vmatpush.bf16.msra.mxu0 %v831
    %997 = vmatpush.bf16.msra.mxu0 %v829
    %998 = vmatpush.bf16.msra.mxu0 %v827
    %999 = vmatpush.bf16.msra.mxu0 %v825
    %1000 = vmatpush.bf16.msra.mxu0 %v823
    %1001 = vmatpush.bf16.msra.mxu0 %v821
    %1002 = vmatpush.bf16.msra.mxu0 %v819
    %1003 = vmatpush.bf16.msra.mxu0 %v817
    %1004 = vmatmul.bf16.gmra.mxu0 %v520
    %v1005 = vpop.f32.mrf.mxu0
    %v1006 = vadd.f32 %v992, %v1005
    %v1007 = vpop.f32.mrf.mxu0
    %v1008 = vadd.f32 %v994, %v1007
    %1009 = vdwg.mxu0
    %1010 = vmatpush.bf16.msra.mxu0 %v847
    %1011 = vmatpush.bf16.msra.mxu0 %v845
    %1012 = vmatpush.bf16.msra.mxu0 %v843
    %1013 = vmatpush.bf16.msra.mxu0 %v841
    %1014 = vmatpush.bf16.msra.mxu0 %v839
    %1015 = vmatpush.bf16.msra.mxu0 %v837
    %1016 = vmatpush.bf16.msra.mxu0 %v835
    %1017 = vmatpush.bf16.msra.mxu0 %v833
    %1018 = vmatmul.bf16.gmra.mxu0 %v521
    %v1019 = vpop.f32.mrf.mxu0
    %v1020 = vadd.f32 %v1006, %v1019
    %v1021 = vpop.f32.mrf.mxu0
    %v1022 = vadd.f32 %v1008, %v1021
    %1023 = vdwg.mxu0
    %v1024 = vxor.u32 %v964, 2147483648
    %v1025 = vxor.u32 %v1020, 2147483648
    %v1026 = vxor.u32 %v966, 2147483648
    %v1027 = vxor.u32 %v1022, 2147483648
    %v1028 = vmul.f32 %v1024, 1.442695
    %v1029 = vpow.pop %v1028
    %v1030 = vmul.f32 %v1025, 1.442695
    %v1031 = vpow.pop %v1030
    %v1032 = vmul.f32 %v1026, 1.442695
    %v1033 = vpow.pop %v1032
    %v1034 = vmul.f32 %v1027, 1.442695
    %v1035 = vpow.pop %v1034
    %v1036 = vadd.f32 %v1029, 1.0
    %v1037 = vadd.f32 %v1031, 1.0
    %v1038 = vadd.f32 %v1033, 1.0
    %v1039 = vadd.f32 %v1035, 1.0
    %v1040 = vrcp.pop %v1036
    %v1041 = vmul.f32 %v1036, %v1040
    %v1042 = vsub.f32 1.0, %v1041
    %v1043 = vmul.f32 %v1040, %v1042
    %v1044 = vadd.f32 %v1040, %v1043
    %vm1045 = vweird.f32 %v1036
    %vm1046 = vweird.f32 %v1040
    %vm1047 = vmor %vm1045, %vm1046
    %v1048 = vsel %vm1047, %v1040, %v1044
    %v1049 = vand.u32 2147483647, %v1036
    %vm1050 = vcmp.eq.f32.partialorder %v1049, 8.507059e+37
    %v1051 = vand.u32 %v1036, 2147483648
    %v1052 = vor.u32 1.1754944e-38, %v1051
    %v1053 = vsel %vm1050, %v1052, %v1048
    %v1054 = vmul.f32 1.0, %v1053
    %v1055 = vrcp.pop %v1037
    %v1056 = vmul.f32 %v1037, %v1055
    %v1057 = vsub.f32 1.0, %v1056
    %v1058 = vmul.f32 %v1055, %v1057
    %v1059 = vadd.f32 %v1055, %v1058
    %vm1060 = vweird.f32 %v1037
    %vm1061 = vweird.f32 %v1055
    %vm1062 = vmor %vm1060, %vm1061
    %v1063 = vsel %vm1062, %v1055, %v1059
    %v1064 = vand.u32 2147483647, %v1037
    %vm1065 = vcmp.eq.f32.partialorder %v1064, 8.507059e+37
    %v1066 = vand.u32 %v1037, 2147483648
    %v1067 = vor.u32 1.1754944e-38, %v1066
    %v1068 = vsel %vm1065, %v1067, %v1063
    %v1069 = vmul.f32 1.0, %v1068
    %v1070 = vrcp.pop %v1038
    %v1071 = vmul.f32 %v1038, %v1070
    %v1072 = vsub.f32 1.0, %v1071
    %v1073 = vmul.f32 %v1070, %v1072
    %v1074 = vadd.f32 %v1070, %v1073
    %vm1075 = vweird.f32 %v1038
    %vm1076 = vweird.f32 %v1070
    %vm1077 = vmor %vm1075, %vm1076
    %v1078 = vsel %vm1077, %v1070, %v1074
    %v1079 = vand.u32 2147483647, %v1038
    %vm1080 = vcmp.eq.f32.partialorder %v1079, 8.507059e+37
    %v1081 = vand.u32 %v1038, 2147483648
    %v1082 = vor.u32 1.1754944e-38, %v1081
    %v1083 = vsel %vm1080, %v1082, %v1078
    %v1084 = vmul.f32 1.0, %v1083
    %v1085 = vrcp.pop %v1039
    %v1086 = vmul.f32 %v1039, %v1085
    %v1087 = vsub.f32 1.0, %v1086
    %v1088 = vmul.f32 %v1085, %v1087
    %v1089 = vadd.f32 %v1085, %v1088
    %vm1090 = vweird.f32 %v1039
    %vm1091 = vweird.f32 %v1085
    %vm1092 = vmor %vm1090, %vm1091
    %v1093 = vsel %vm1092, %v1085, %v1089
    %v1094 = vand.u32 2147483647, %v1039
    %vm1095 = vcmp.eq.f32.partialorder %v1094, 8.507059e+37
    %v1096 = vand.u32 %v1039, 2147483648
    %v1097 = vor.u32 1.1754944e-38, %v1096
    %v1098 = vsel %vm1095, %v1097, %v1093
    %v1099 = vmul.f32 1.0, %v1098
    %v1100 = vld [vmem:[%s8] sm:$0x3]
    %v1102 = vperm.slane %v1100, 0
    %v1103 = vperm.slane %v1100, 1
    %v1106 = vmul.f32 %v1054, %v1102
    %v1107 = vmul.f32 %v1069, %v1103
    %v1108 = vmul.f32 %v1084, %v1102
    %v1109 = vmul.f32 %v1099, %v1103
    %v1110 = vadd.f32 %v1106, %v1107
    %1111 = vadd.xlane.f32.xlu0 %v1110
    %v1112 = vpop.xlane.xlu0 %1111
    %v1113 = vadd.f32 %v1108, %v1109
    %1114 = vadd.xlane.f32.xlu0 %v1113
    %v1115 = vpop.xlane.xlu0 %1114
    %v1116 = vld [vmem:[#allocation2] sm:$0x1]
    %v1118 = vperm.slane %v1116, 0
    %v1120 = vadd.f32 %v1112, %v1118
    %v1121 = vadd.f32 %v1115, %v1118
    %v1122 = vxor.u32 %v1120, 2147483648
    %v1123 = vxor.u32 %v1121, 2147483648
    %v1124 = vmul.f32 %v1122, 1.442695
    %v1125 = vpow.pop %v1124
    %v1126 = vmul.f32 %v1123, 1.442695
    %v1127 = vpow.pop %v1126
    %v1128 = vadd.f32 %v1125, 1.0
    %v1129 = vadd.f32 %v1127, 1.0
    %v1130 = vrcp.pop %v1128
    %v1131 = vmul.f32 %v1128, %v1130
    %v1132 = vsub.f32 1.0, %v1131
    %v1133 = vmul.f32 %v1130, %v1132
    %v1134 = vadd.f32 %v1130, %v1133
    %vm1135 = vweird.f32 %v1128
    %vm1136 = vweird.f32 %v1130
    %vm1137 = vmor %vm1135, %vm1136
    %v1138 = vsel %vm1137, %v1130, %v1134
    %v1139 = vand.u32 2147483647, %v1128
    %vm1140 = vcmp.eq.f32.partialorder %v1139, 8.507059e+37
    %v1141 = vand.u32 %v1128, 2147483648
    %v1142 = vor.u32 1.1754944e-38, %v1141
    %v1143 = vsel %vm1140, %v1142, %v1138
    %v1144 = vmul.f32 1.0, %v1143
    %v1145 = vrcp.pop %v1129
    %v1146 = vmul.f32 %v1129, %v1145
    %v1147 = vsub.f32 1.0, %v1146
    %v1148 = vmul.f32 %v1145, %v1147
    %v1149 = vadd.f32 %v1145, %v1148
    %vm1150 = vweird.f32 %v1129
    %vm1151 = vweird.f32 %v1145
    %vm1152 = vmor %vm1150, %vm1151
    %v1153 = vsel %vm1152, %v1145, %v1149
    %v1154 = vand.u32 2147483647, %v1129
    %vm1155 = vcmp.eq.f32.partialorder %v1154, 8.507059e+37
    %v1156 = vand.u32 %v1129, 2147483648
    %v1157 = vor.u32 1.1754944e-38, %v1156
    %v1158 = vsel %vm1155, %v1157, %v1153
    %v1159 = vmul.f32 1.0, %v1158
    %vm1160 = vcmask 7168
    %1161 = vst.msk [vmem:[%s10] sm:$0xff] %vm1160, %v1144
    %1162 = vst.msk [vmem:[%s10 + $0x8] sm:$0xff] %vm1160, %v1159
    // Predicated region
    $region58: #{tpu_custom_call.1} parent=1 // pred_check
      _
    $region59: #{tpu_custom_call.1} parent=1 // pred_check_branch
      %1164 = sbr.rel (0) target = $region61
    $region60: #{tpu_custom_call.1} parent=1 // pred_region
      _
    $region61: #{tpu_custom_call.1} parent=1 // pred_fallthru
      _
    // Predicated region
    $region62: #{tpu_custom_call.1} parent=1 // pred_check
      _
    $region63: #{tpu_custom_call.1} parent=1 // pred_check_branch
      %1166 = sbr.rel (0) target = $region65
    $region64: #{tpu_custom_call.1} parent=1 // pred_region
      _
    $region65: #{tpu_custom_call.1} parent=1 // pred_fallthru
      _
    %1167 = vsyncpa [#allocation4], 1
    %1168 = vsyncpa [#allocation6], 1
    %1169 = vsyncpa [#allocation9], 1

</llo_original>
